<compile_context>
chip_gen: v5e
topology: v5e:2x2
jax: 0.10.0
libtpu: 0.0.40
codegen_flags: <defaults>
</compile_context>

<pallas_src>
import jax
import jax.numpy as jnp
from jax.experimental import pallas as pl
from jax.experimental.pallas import tpu as pltpu


def fnn_kernel(x_ref, w1_ref, b1_ref, wh_ref, bh_ref, y_ref):
    # Hidden layer: Linear(1024 -> 32). Cast f32 x -> bf16 in-kernel (hidden
    # under the x DMA), MXU accumulates in f32.
    x_bf = x_ref[...].astype(jnp.bfloat16)
    h = jnp.dot(x_bf, w1_ref[...], preferred_element_type=jnp.float32)
    # TODO(synk): Dropout(0.25) is identity in eval/inference mode; training-mode
    # stochastic masking (pltpu.prng_seed / prng_random_bits) is not implemented.
    h = jnp.maximum(h + b1_ref[...], 0.0)  # bias + ReLU in f32

    # Fused heads: [Linear(32->10) | Linear(32->2)] as one (32, 12) bf16 matmul,
    # f32 accumulation, f32 bias add.
    y_ref[...] = (
        jnp.dot(h.astype(jnp.bfloat16), wh_ref[...],
                preferred_element_type=jnp.float32)
        + bh_ref[...]
    )


def fnn_forward(x, w1, b1, w_loc, b_loc, w_mem, b_mem, *, tile_b=2048):
    """x: (B, 1024) f32. Weights stored as (in, out); equivalent to x @ W.T + b
    with PyTorch's (out, in) layout. Returns (Yhat_loc (B,10), Yhat_mem (B,2))."""
    B = x.shape[0]

    # Fuse the two heads into one lane-block: (32, 12) / (1, 12).
    # One-time tiny casts (weights only); x itself stays f32 and is cast in-kernel.
    w1_bf = w1.astype(jnp.bfloat16)
    w_heads = jnp.concatenate([w_loc, w_mem], axis=1).astype(jnp.bfloat16)  # (32,12)
    b_heads = jnp.concatenate([b_loc, b_mem], axis=1)                       # (1,12) f32

    # Tile the batch. No padding: if B fits in one tile, use the full batch
    # (block dim == full array dim is always legal); otherwise use a multiple
    # of 8 and let Pallas clip the ragged last block.
    if B <= tile_b:
        tb = B
    else:
        tb = (tile_b // 8) * 8
    n_blocks = pl.cdiv(B, tb)

    cost = pl.CostEstimate(
        flops=2 * B * 1024 * 32 + 2 * B * 32 * 12,
        transcendentals=0,
        bytes_accessed=(
            B * 1024 * 4                  # x (f32, single HBM read)
            + 1024 * 32 * 2               # w1 (bf16)
            + 32 * 12 * 2                 # fused head weights (bf16)
            + (32 + 12) * 4               # biases (f32)
            + B * 12 * 4                  # fused output (f32)
        ),
    )

    y = pl.pallas_call(
        fnn_kernel,
        out_shape=jax.ShapeDtypeStruct((B, 12), jnp.float32),
        grid=(n_blocks,),
        in_specs=[
            pl.BlockSpec((tb, 1024), lambda i: (i, 0)),   # x: streamed per step
            pl.BlockSpec((1024, 32), lambda i: (0, 0)),   # w1: resident in VMEM
            pl.BlockSpec((1, 32), lambda i: (0, 0)),      # b1: resident
            pl.BlockSpec((32, 12), lambda i: (0, 0)),     # fused head W: resident
            pl.BlockSpec((1, 12), lambda i: (0, 0)),      # fused head b: resident
        ],
        out_specs=pl.BlockSpec((tb, 12), lambda i: (i, 0)),
        compiler_params=pltpu.CompilerParams(
            dimension_semantics=("parallel",),
            vmem_limit_bytes=48 * 1024 * 1024,
        ),
        cost_estimate=cost,
    )(x, w1_bf, b1, w_heads, b_heads)

    # Un-fuse the heads.
    return y[:, :10], y[:, 10:12]


def init_params(key):
    # Deterministic synthetic parameters matching the PyTorch module shapes:
    #   layer[0]:       Linear(1024, 32)
    #   loc_classifier: Linear(32, 10)
    #   mem_classifier: Linear(32, 2)
    k1, k2, k3, k4, k5, k6 = jax.random.split(key, 6)
    w1 = jax.random.normal(k1, (1024, 32), jnp.float32) * 0.02
    b1 = jax.random.normal(k2, (1, 32), jnp.float32) * 0.02
    w_loc = jax.random.normal(k3, (32, 10), jnp.float32) * 0.02
    b_loc = jax.random.normal(k4, (1, 10), jnp.float32) * 0.02
    w_mem = jax.random.normal(k5, (32, 2), jnp.float32) * 0.02
    b_mem = jax.random.normal(k6, (1, 2), jnp.float32) * 0.02
    return w1, b1, w_loc, b_loc, w_mem, b_mem


def _reference(x, params):
    # Pure-JAX reference (eval-mode dropout = identity) with the same bf16
    # casts / f32 accumulation as the kernel.
    w1, b1, w_loc, b_loc, w_mem, b_mem = params
    w_heads = jnp.concatenate([w_loc, w_mem], axis=1).astype(jnp.bfloat16)
    b_heads = jnp.concatenate([b_loc, b_mem], axis=1)
    h = jnp.maximum(
        jnp.dot(x.astype(jnp.bfloat16), w1.astype(jnp.bfloat16),
                preferred_element_type=jnp.float32) + b1, 0.0)
    y = jnp.dot(h.astype(jnp.bfloat16), w_heads,
                preferred_element_type=jnp.float32) + b_heads
    return y[:, :10], y[:, 10:12]


if __name__ == "__main__":
    key = jax.random.PRNGKey(0)
    kx, kx2, kp = jax.random.split(key, 3)
    params = init_params(kp)

    # Case 1: small batch, single block (block dim == full batch).
    B = 8
    x = jax.random.normal(kx, (B, 1024), jnp.float32)
    yloc, ymem = fnn_forward(x, *params)
    (yloc, ymem) = jax.block_until_ready((yloc, ymem))
    yloc_ref, ymem_ref = _reference(x, params)
    assert yloc.shape == (B, 10) and ymem.shape == (B, 2)
    assert jnp.allclose(yloc, yloc_ref, atol=5e-3, rtol=5e-3)
    assert jnp.allclose(ymem, ymem_ref, atol=5e-3, rtol=5e-3)

    # Case 2: ragged batch (exercises the clipped last grid block, no padding).
    B2 = 20
    x2 = jax.random.normal(kx2, (B2, 1024), jnp.float32)
    yloc2, ymem2 = fnn_forward(x2, *params, tile_b=8)
    (yloc2, ymem2) = jax.block_until_ready((yloc2, ymem2))
    yloc2_ref, ymem2_ref = _reference(x2, params)
    assert yloc2.shape == (B2, 10) and ymem2.shape == (B2, 2)
    assert jnp.allclose(yloc2, yloc2_ref, atol=5e-3, rtol=5e-3)
    assert jnp.allclose(ymem2, ymem2_ref, atol=5e-3, rtol=5e-3)

    print("KERNEL_OK")
</pallas_src>

<mosaic_0001>
module attributes {stable_mosaic.version = 11 : i64} {
  func.func @fnn_kernel(%arg0: i32, %arg1: memref<8x1024xf32, #tpu.memory_space<vmem>>, %arg2: memref<1024x32xbf16, #tpu.memory_space<vmem>>, %arg3: memref<1x32xf32, #tpu.memory_space<vmem>>, %arg4: memref<32x12xbf16, #tpu.memory_space<vmem>>, %arg5: memref<1x12xf32, #tpu.memory_space<vmem>>, %arg6: memref<8x12xf32, #tpu.memory_space<vmem>>) attributes {dimension_semantics = [#tpu.dimension_semantics<parallel>], iteration_bounds = array<i64: 1>, scalar_prefetch = 0 : i64, scratch_operands = 0 : i64, tpu.core_type = #tpu.core_type<tc>, window_params = [{transform_indices = @transform_0, window_bounds = array<i64: 8, 1024>}, {pipeline_mode = #tpu.pipeline_mode<synchronous>, transform_indices = @transform_1, window_bounds = array<i64: 1024, 32>}, {pipeline_mode = #tpu.pipeline_mode<synchronous>, transform_indices = @transform_2, window_bounds = array<i64: 1, 32>}, {pipeline_mode = #tpu.pipeline_mode<synchronous>, transform_indices = @transform_3, window_bounds = array<i64: 32, 12>}, {pipeline_mode = #tpu.pipeline_mode<synchronous>, transform_indices = @transform_4, window_bounds = array<i64: 1, 12>}, {transform_indices = @transform_5, window_bounds = array<i64: 8, 12>}]} {
    %c0 = arith.constant 0 : index
    %c0_0 = arith.constant 0 : index
    %0 = vector.load %arg1[%c0, %c0_0] : memref<8x1024xf32, #tpu.memory_space<vmem>>, vector<8x1024xf32>
    %1 = arith.truncf %0 : vector<8x1024xf32> to vector<8x1024xbf16>
    %c0_1 = arith.constant 0 : index
    %c0_2 = arith.constant 0 : index
    %2 = vector.load %arg2[%c0_1, %c0_2] : memref<1024x32xbf16, #tpu.memory_space<vmem>>, vector<1024x32xbf16>
    %cst = arith.constant dense<0.000000e+00> : vector<8x32xf32>
    %3 = tpu.matmul %1, %2, %cst {dimension_numbers = #tpu.dot_dimension_numbers<[1], [0], [0], [1], [0, 0, 1, 1], [], []>} : vector<8x1024xbf16>, vector<1024x32xbf16>, vector<8x32xf32> -> vector<8x32xf32>
    %c0_3 = arith.constant 0 : index
    %c0_4 = arith.constant 0 : index
    %4 = vector.load %arg3[%c0_3, %c0_4] : memref<1x32xf32, #tpu.memory_space<vmem>>, vector<1x32xf32>
    %5 = vector.broadcast %4 : vector<1x32xf32> to vector<8x32xf32>
    %6 = arith.addf %3, %5 : vector<8x32xf32>
    %cst_5 = arith.constant 0.000000e+00 : f32
    %7 = vector.broadcast %cst_5 : f32 to vector<8x32xf32>
    %8 = arith.maximumf %6, %7 : vector<8x32xf32>
    %9 = arith.truncf %8 : vector<8x32xf32> to vector<8x32xbf16>
    %c0_6 = arith.constant 0 : index
    %c0_7 = arith.constant 0 : index
    %10 = vector.load %arg4[%c0_6, %c0_7] : memref<32x12xbf16, #tpu.memory_space<vmem>>, vector<32x12xbf16>
    %cst_8 = arith.constant dense<0.000000e+00> : vector<8x12xf32>
    %11 = tpu.matmul %9, %10, %cst_8 {dimension_numbers = #tpu.dot_dimension_numbers<[1], [0], [0], [1], [0, 0, 1, 1], [], []>} : vector<8x32xbf16>, vector<32x12xbf16>, vector<8x12xf32> -> vector<8x12xf32>
    %c0_9 = arith.constant 0 : index
    %c0_10 = arith.constant 0 : index
    %12 = vector.load %arg5[%c0_9, %c0_10] : memref<1x12xf32, #tpu.memory_space<vmem>>, vector<1x12xf32>
    %13 = vector.broadcast %12 : vector<1x12xf32> to vector<8x12xf32>
    %14 = arith.addf %11, %13 : vector<8x12xf32>
    %c0_11 = arith.constant 0 : index
    %c0_12 = arith.constant 0 : index
    %15 = vector.load %arg6[%c0_11, %c0_12] : memref<8x12xf32, #tpu.memory_space<vmem>>, vector<8x12xf32>
    tpu.vector_store %arg6[%c0_11, %c0_12], %14 {strides = array<i32>} : memref<8x12xf32, #tpu.memory_space<vmem>>, vector<8x12xf32>,
    return
  }
  func.func @transform_0(%arg0: i32) -> (i32, i32) {
    %c0_i32 = arith.constant 0 : i32
    %c0_i32_0 = arith.constant 0 : i32
    return %arg0, %c0_i32 : i32, i32
  }
  func.func @transform_1(%arg0: i32) -> (i32, i32) {
    %c0_i32 = arith.constant 0 : i32
    %c0_i32_0 = arith.constant 0 : i32
    %c0_i32_1 = arith.constant 0 : i32
    return %c0_i32, %c0_i32_0 : i32, i32
  }
  func.func @transform_2(%arg0: i32) -> (i32, i32) {
    %c0_i32 = arith.constant 0 : i32
    %c0_i32_0 = arith.constant 0 : i32
    %c0_i32_1 = arith.constant 0 : i32
    return %c0_i32, %c0_i32_0 : i32, i32
  }
  func.func @transform_3(%arg0: i32) -> (i32, i32) {
    %c0_i32 = arith.constant 0 : i32
    %c0_i32_0 = arith.constant 0 : i32
    %c0_i32_1 = arith.constant 0 : i32
    return %c0_i32, %c0_i32_0 : i32, i32
  }
  func.func @transform_4(%arg0: i32) -> (i32, i32) {
    %c0_i32 = arith.constant 0 : i32
    %c0_i32_0 = arith.constant 0 : i32
    %c0_i32_1 = arith.constant 0 : i32
    return %c0_i32, %c0_i32_0 : i32, i32
  }
  func.func @transform_5(%arg0: i32) -> (i32, i32) {
    %c0_i32 = arith.constant 0 : i32
    %c0_i32_0 = arith.constant 0 : i32
    return %arg0, %c0_i32 : i32, i32
  }
}

</mosaic_0001>

<llo_original>
// kernel: tpu_custom_call.1
$region0: #{tpu_custom_call.1}
  #allocation0 [shape = 'u32[]', space=smem, size = 0x4, offset = 0x4, fixed_abs, tag = 'smem constant byte address 0x4 - core index']
  #allocation1 [shape = 'u32[72,128]{1,0:T(1,128)}', space=vmem, size = 0x9000, scoped, tag = 'internal scratch']
  %s0 = inlined_call_operand.vmem [shape: f32[8,1024], index: 0, kind: input, shape index: {}]
  %s1 = inlined_call_operand.vmem [shape: bf16[1024,32], index: 1, kind: input, shape index: {}]
  %s2 = inlined_call_operand.vmem [shape: f32[1,32], index: 2, kind: input, shape index: {}]
  %s3 = inlined_call_operand.vmem [shape: bf16[32,12], index: 3, kind: input, shape index: {}]
  %s4 = inlined_call_operand.vmem [shape: f32[1,12], index: 4, kind: input, shape index: {}]
  %s5 = inlined_call_operand.hbm [shape: f32[8,12], index: 5, kind: output, shape index: {}]
  %s6 = sld [smem:[#allocation0]]
  $region30: #{tpu_custom_call.1} parent=0
    _
  %s8 = ssub.s32 1, %s6
  %s9 = scalar_select 0, %s8, %s6
  $region1: #{tpu_custom_call.1} parent=0
    #allocation2 [shape = 'u8[4096]{0}', space=vmem, size = 0x1000, scoped, tag = 'output window, operand 0, single buffered']
    #allocation3 [shape = 's32[1]{0}', space=sflag, size = 0x4, scoped, tag = 'scoped memory for tpu_custom_call.1']
    %10 = vsyncpa [#allocation3], 0
    // Predicated region
    $region2: #{tpu_custom_call.1} parent=1 // pred_check
      _
    $region3: #{tpu_custom_call.1} parent=1 // pred_check_branch
      %12 = sbr.rel (0) target = $region5
    $region4: #{tpu_custom_call.1} parent=1 // pred_region
      _
    $region5: #{tpu_custom_call.1} parent=1 // pred_fallthru
      _
    // Predicated region
    $region6: #{tpu_custom_call.1} parent=1 // pred_check
      _
    $region7: #{tpu_custom_call.1} parent=1 // pred_check_branch
      %14 = sbr.rel (0) target = $region9
    $region8: #{tpu_custom_call.1} parent=1 // pred_region
      _
    $region9: #{tpu_custom_call.1} parent=1 // pred_fallthru
      _
    // Predicated region
    $region10: #{tpu_custom_call.1} parent=1 // pred_check
      _
    $region11: #{tpu_custom_call.1} parent=1 // pred_check_branch
      %16 = sbr.rel (0) target = $region13
    $region12: #{tpu_custom_call.1} parent=1 // pred_region
      _
    $region13: #{tpu_custom_call.1} parent=1 // pred_fallthru
      _
    // Predicated region
    $region14: #{tpu_custom_call.1} parent=1 // pred_check
      _
    $region15: #{tpu_custom_call.1} parent=1 // pred_check_branch
      %18 = sbr.rel (0) target = $region17
    $region16: #{tpu_custom_call.1} parent=1 // pred_region
      _
    $region17: #{tpu_custom_call.1} parent=1 // pred_fallthru
      _
    // Predicated region
    $region18: #{tpu_custom_call.1} parent=1 // pred_check
      _
    $region19: #{tpu_custom_call.1} parent=1 // pred_check_branch
      %20 = sbr.rel (0) target = $region21
    $region20: #{tpu_custom_call.1} parent=1 // pred_region
      _
    $region21: #{tpu_custom_call.1} parent=1 // pred_fallthru
      _
    %v22 = vld [vmem:[%s0] sm:$0xff]
    %v23 = vld [vmem:[%s0 + $0x8] sm:$0xff]
    %v24 = vld [vmem:[%s0 + $0x10] sm:$0xff]
    %v25 = vld [vmem:[%s0 + $0x18] sm:$0xff]
    %v26 = vld [vmem:[%s0 + $0x20] sm:$0xff]
    %v27 = vld [vmem:[%s0 + $0x28] sm:$0xff]
    %v28 = vld [vmem:[%s0 + $0x30] sm:$0xff]
    %v29 = vld [vmem:[%s0 + $0x38] sm:$0xff]
    %v30 = vpack.c.bf16 %v22, %v22
    %v31 = vpack.c.bf16 %v23, %v23
    %v32 = vpack.c.bf16 %v24, %v24
    %v33 = vpack.c.bf16 %v25, %v25
    %v34 = vpack.c.bf16 %v26, %v26
    %v35 = vpack.c.bf16 %v27, %v27
    %v36 = vpack.c.bf16 %v28, %v28
    %v37 = vpack.c.bf16 %v29, %v29
    %v38 = vld [vmem:[%s1] sm:$0xf]
    %v39 = vld [vmem:[%s1 + $0x4] sm:$0xf]
    %v40 = vld [vmem:[%s1 + $0x8] sm:$0xf]
    %v41 = vld [vmem:[%s1 + $0xc] sm:$0xf]
    %v42 = vld [vmem:[%s1 + $0x10] sm:$0xf]
    %v43 = vld [vmem:[%s1 + $0x14] sm:$0xf]
    %v44 = vld [vmem:[%s1 + $0x18] sm:$0xf]
    %v45 = vld [vmem:[%s1 + $0x1c] sm:$0xf]
    %v46 = vld [vmem:[%s1 + $0x20] sm:$0xf]
    %v47 = vld [vmem:[%s1 + $0x24] sm:$0xf]
    %v48 = vld [vmem:[%s1 + $0x28] sm:$0xf]
    %v49 = vld [vmem:[%s1 + $0x2c] sm:$0xf]
    %v50 = vld [vmem:[%s1 + $0x30] sm:$0xf]
    %v51 = vld [vmem:[%s1 + $0x34] sm:$0xf]
    %v52 = vld [vmem:[%s1 + $0x38] sm:$0xf]
    %v53 = vld [vmem:[%s1 + $0x3c] sm:$0xf]
    %v54 = vld [vmem:[%s1 + $0x40] sm:$0xf]
    %v55 = vld [vmem:[%s1 + $0x44] sm:$0xf]
    %v56 = vld [vmem:[%s1 + $0x48] sm:$0xf]
    %v57 = vld [vmem:[%s1 + $0x4c] sm:$0xf]
    %v58 = vld [vmem:[%s1 + $0x50] sm:$0xf]
    %v59 = vld [vmem:[%s1 + $0x54] sm:$0xf]
    %v60 = vld [vmem:[%s1 + $0x58] sm:$0xf]
    %v61 = vld [vmem:[%s1 + $0x5c] sm:$0xf]
    %v62 = vld [vmem:[%s1 + $0x60] sm:$0xf]
    %v63 = vld [vmem:[%s1 + $0x64] sm:$0xf]
    %v64 = vld [vmem:[%s1 + $0x68] sm:$0xf]
    %v65 = vld [vmem:[%s1 + $0x6c] sm:$0xf]
    %v66 = vld [vmem:[%s1 + $0x70] sm:$0xf]
    %v67 = vld [vmem:[%s1 + $0x74] sm:$0xf]
    %v68 = vld [vmem:[%s1 + $0x78] sm:$0xf]
    %v69 = vld [vmem:[%s1 + $0x7c] sm:$0xf]
    %v70 = vld [vmem:[%s1 + $0x80] sm:$0xf]
    %v71 = vld [vmem:[%s1 + $0x84] sm:$0xf]
    %v72 = vld [vmem:[%s1 + $0x88] sm:$0xf]
    %v73 = vld [vmem:[%s1 + $0x8c] sm:$0xf]
    %v74 = vld [vmem:[%s1 + $0x90] sm:$0xf]
    %v75 = vld [vmem:[%s1 + $0x94] sm:$0xf]
    %v76 = vld [vmem:[%s1 + $0x98] sm:$0xf]
    %v77 = vld [vmem:[%s1 + $0x9c] sm:$0xf]
    %v78 = vld [vmem:[%s1 + $0xa0] sm:$0xf]
    %v79 = vld [vmem:[%s1 + $0xa4] sm:$0xf]
    %v80 = vld [vmem:[%s1 + $0xa8] sm:$0xf]
    %v81 = vld [vmem:[%s1 + $0xac] sm:$0xf]
    %v82 = vld [vmem:[%s1 + $0xb0] sm:$0xf]
    %v83 = vld [vmem:[%s1 + $0xb4] sm:$0xf]
    %v84 = vld [vmem:[%s1 + $0xb8] sm:$0xf]
    %v85 = vld [vmem:[%s1 + $0xbc] sm:$0xf]
    %v86 = vld [vmem:[%s1 + $0xc0] sm:$0xf]
    %v87 = vld [vmem:[%s1 + $0xc4] sm:$0xf]
    %v88 = vld [vmem:[%s1 + $0xc8] sm:$0xf]
    %v89 = vld [vmem:[%s1 + $0xcc] sm:$0xf]
    %v90 = vld [vmem:[%s1 + $0xd0] sm:$0xf]
    %v91 = vld [vmem:[%s1 + $0xd4] sm:$0xf]
    %v92 = vld [vmem:[%s1 + $0xd8] sm:$0xf]
    %v93 = vld [vmem:[%s1 + $0xdc] sm:$0xf]
    %v94 = vld [vmem:[%s1 + $0xe0] sm:$0xf]
    %v95 = vld [vmem:[%s1 + $0xe4] sm:$0xf]
    %v96 = vld [vmem:[%s1 + $0xe8] sm:$0xf]
    %v97 = vld [vmem:[%s1 + $0xec] sm:$0xf]
    %v98 = vld [vmem:[%s1 + $0xf0] sm:$0xf]
    %v99 = vld [vmem:[%s1 + $0xf4] sm:$0xf]
    %v100 = vld [vmem:[%s1 + $0xf8] sm:$0xf]
    %v101 = vld [vmem:[%s1 + $0xfc] sm:$0xf]
    %v102 = vld [vmem:[%s1 + $0x100] sm:$0xf]
    %v103 = vld [vmem:[%s1 + $0x104] sm:$0xf]
    %v104 = vld [vmem:[%s1 + $0x108] sm:$0xf]
    %v105 = vld [vmem:[%s1 + $0x10c] sm:$0xf]
    %v106 = vld [vmem:[%s1 + $0x110] sm:$0xf]
    %v107 = vld [vmem:[%s1 + $0x114] sm:$0xf]
    %v108 = vld [vmem:[%s1 + $0x118] sm:$0xf]
    %v109 = vld [vmem:[%s1 + $0x11c] sm:$0xf]
    %v110 = vld [vmem:[%s1 + $0x120] sm:$0xf]
    %v111 = vld [vmem:[%s1 + $0x124] sm:$0xf]
    %v112 = vld [vmem:[%s1 + $0x128] sm:$0xf]
    %v113 = vld [vmem:[%s1 + $0x12c] sm:$0xf]
    %v114 = vld [vmem:[%s1 + $0x130] sm:$0xf]
    %v115 = vld [vmem:[%s1 + $0x134] sm:$0xf]
    %v116 = vld [vmem:[%s1 + $0x138] sm:$0xf]
    %v117 = vld [vmem:[%s1 + $0x13c] sm:$0xf]
    %v118 = vld [vmem:[%s1 + $0x140] sm:$0xf]
    %v119 = vld [vmem:[%s1 + $0x144] sm:$0xf]
    %v120 = vld [vmem:[%s1 + $0x148] sm:$0xf]
    %v121 = vld [vmem:[%s1 + $0x14c] sm:$0xf]
    %v122 = vld [vmem:[%s1 + $0x150] sm:$0xf]
    %v123 = vld [vmem:[%s1 + $0x154] sm:$0xf]
    %v124 = vld [vmem:[%s1 + $0x158] sm:$0xf]
    %v125 = vld [vmem:[%s1 + $0x15c] sm:$0xf]
    %v126 = vld [vmem:[%s1 + $0x160] sm:$0xf]
    %v127 = vld [vmem:[%s1 + $0x164] sm:$0xf]
    %v128 = vld [vmem:[%s1 + $0x168] sm:$0xf]
    %v129 = vld [vmem:[%s1 + $0x16c] sm:$0xf]
    %v130 = vld [vmem:[%s1 + $0x170] sm:$0xf]
    %v131 = vld [vmem:[%s1 + $0x174] sm:$0xf]
    %v132 = vld [vmem:[%s1 + $0x178] sm:$0xf]
    %v133 = vld [vmem:[%s1 + $0x17c] sm:$0xf]
    %v134 = vld [vmem:[%s1 + $0x180] sm:$0xf]
    %v135 = vld [vmem:[%s1 + $0x184] sm:$0xf]
    %v136 = vld [vmem:[%s1 + $0x188] sm:$0xf]
    %v137 = vld [vmem:[%s1 + $0x18c] sm:$0xf]
    %v138 = vld [vmem:[%s1 + $0x190] sm:$0xf]
    %v139 = vld [vmem:[%s1 + $0x194] sm:$0xf]
    %v140 = vld [vmem:[%s1 + $0x198] sm:$0xf]
    %v141 = vld [vmem:[%s1 + $0x19c] sm:$0xf]
    %v142 = vld [vmem:[%s1 + $0x1a0] sm:$0xf]
    %v143 = vld [vmem:[%s1 + $0x1a4] sm:$0xf]
    %v144 = vld [vmem:[%s1 + $0x1a8] sm:$0xf]
    %v145 = vld [vmem:[%s1 + $0x1ac] sm:$0xf]
    %v146 = vld [vmem:[%s1 + $0x1b0] sm:$0xf]
    %v147 = vld [vmem:[%s1 + $0x1b4] sm:$0xf]
    %v148 = vld [vmem:[%s1 + $0x1b8] sm:$0xf]
    %v149 = vld [vmem:[%s1 + $0x1bc] sm:$0xf]
    %v150 = vld [vmem:[%s1 + $0x1c0] sm:$0xf]
    %v151 = vld [vmem:[%s1 + $0x1c4] sm:$0xf]
    %v152 = vld [vmem:[%s1 + $0x1c8] sm:$0xf]
    %v153 = vld [vmem:[%s1 + $0x1cc] sm:$0xf]
    %v154 = vld [vmem:[%s1 + $0x1d0] sm:$0xf]
    %v155 = vld [vmem:[%s1 + $0x1d4] sm:$0xf]
    %v156 = vld [vmem:[%s1 + $0x1d8] sm:$0xf]
    %v157 = vld [vmem:[%s1 + $0x1dc] sm:$0xf]
    %v158 = vld [vmem:[%s1 + $0x1e0] sm:$0xf]
    %v159 = vld [vmem:[%s1 + $0x1e4] sm:$0xf]
    %v160 = vld [vmem:[%s1 + $0x1e8] sm:$0xf]
    %v161 = vld [vmem:[%s1 + $0x1ec] sm:$0xf]
    %v162 = vld [vmem:[%s1 + $0x1f0] sm:$0xf]
    %v163 = vld [vmem:[%s1 + $0x1f4] sm:$0xf]
    %v164 = vld [vmem:[%s1 + $0x1f8] sm:$0xf]
    %v165 = vld [vmem:[%s1 + $0x1fc] sm:$0xf]
    %v166 = vld [vmem:[%s2] sm:$0x1]
    %v168 = vperm.slane %v166, 0
    %v298 = vunpack.c.l.b16 %v38
    %v299 = vunpack.c.l.b16 %v39
    %v300 = vunpack.c.l.b16 %v40
    %v301 = vunpack.c.l.b16 %v41
    %v302 = vunpack.c.l.b16 %v42
    %v303 = vunpack.c.l.b16 %v43
    %v304 = vunpack.c.l.b16 %v44
    %v305 = vunpack.c.l.b16 %v45
    %v306 = vunpack.c.l.b16 %v46
    %v307 = vunpack.c.l.b16 %v47
    %v308 = vunpack.c.l.b16 %v48
    %v309 = vunpack.c.l.b16 %v49
    %v310 = vunpack.c.l.b16 %v50
    %v311 = vunpack.c.l.b16 %v51
    %v312 = vunpack.c.l.b16 %v52
    %v313 = vunpack.c.l.b16 %v53
    %v314 = vunpack.c.l.b16 %v54
    %v315 = vunpack.c.l.b16 %v55
    %v316 = vunpack.c.l.b16 %v56
    %v317 = vunpack.c.l.b16 %v57
    %v318 = vunpack.c.l.b16 %v58
    %v319 = vunpack.c.l.b16 %v59
    %v320 = vunpack.c.l.b16 %v60
    %v321 = vunpack.c.l.b16 %v61
    %v322 = vunpack.c.l.b16 %v62
    %v323 = vunpack.c.l.b16 %v63
    %v324 = vunpack.c.l.b16 %v64
    %v325 = vunpack.c.l.b16 %v65
    %v326 = vunpack.c.l.b16 %v66
    %v327 = vunpack.c.l.b16 %v67
    %v328 = vunpack.c.l.b16 %v68
    %v329 = vunpack.c.l.b16 %v69
    %v330 = vunpack.c.l.b16 %v70
    %v331 = vunpack.c.l.b16 %v71
    %v332 = vunpack.c.l.b16 %v72
    %v333 = vunpack.c.l.b16 %v73
    %v334 = vunpack.c.l.b16 %v74
    %v335 = vunpack.c.l.b16 %v75
    %v336 = vunpack.c.l.b16 %v76
    %v337 = vunpack.c.l.b16 %v77
    %v338 = vunpack.c.l.b16 %v78
    %v339 = vunpack.c.l.b16 %v79
    %v340 = vunpack.c.l.b16 %v80
    %v341 = vunpack.c.l.b16 %v81
    %v342 = vunpack.c.l.b16 %v82
    %v343 = vunpack.c.l.b16 %v83
    %v344 = vunpack.c.l.b16 %v84
    %v345 = vunpack.c.l.b16 %v85
    %v346 = vunpack.c.l.b16 %v86
    %v347 = vunpack.c.l.b16 %v87
    %v348 = vunpack.c.l.b16 %v88
    %v349 = vunpack.c.l.b16 %v89
    %v350 = vunpack.c.l.b16 %v90
    %v351 = vunpack.c.l.b16 %v91
    %v352 = vunpack.c.l.b16 %v92
    %v353 = vunpack.c.l.b16 %v93
    %v354 = vunpack.c.l.b16 %v94
    %v355 = vunpack.c.l.b16 %v95
    %v356 = vunpack.c.l.b16 %v96
    %v357 = vunpack.c.l.b16 %v97
    %v358 = vunpack.c.l.b16 %v98
    %v359 = vunpack.c.l.b16 %v99
    %v360 = vunpack.c.l.b16 %v100
    %v361 = vunpack.c.l.b16 %v101
    %v362 = vunpack.c.l.b16 %v102
    %v363 = vunpack.c.l.b16 %v103
    %v364 = vunpack.c.l.b16 %v104
    %v365 = vunpack.c.l.b16 %v105
    %v366 = vunpack.c.l.b16 %v106
    %v367 = vunpack.c.l.b16 %v107
    %v368 = vunpack.c.l.b16 %v108
    %v369 = vunpack.c.l.b16 %v109
    %v370 = vunpack.c.l.b16 %v110
    %v371 = vunpack.c.l.b16 %v111
    %v372 = vunpack.c.l.b16 %v112
    %v373 = vunpack.c.l.b16 %v113
    %v374 = vunpack.c.l.b16 %v114
    %v375 = vunpack.c.l.b16 %v115
    %v376 = vunpack.c.l.b16 %v116
    %v377 = vunpack.c.l.b16 %v117
    %v378 = vunpack.c.l.b16 %v118
    %v379 = vunpack.c.l.b16 %v119
    %v380 = vunpack.c.l.b16 %v120
    %v381 = vunpack.c.l.b16 %v121
    %v382 = vunpack.c.l.b16 %v122
    %v383 = vunpack.c.l.b16 %v123
    %v384 = vunpack.c.l.b16 %v124
    %v385 = vunpack.c.l.b16 %v125
    %v386 = vunpack.c.l.b16 %v126
    %v387 = vunpack.c.l.b16 %v127
    %v388 = vunpack.c.l.b16 %v128
    %v389 = vunpack.c.l.b16 %v129
    %v390 = vunpack.c.l.b16 %v130
    %v391 = vunpack.c.l.b16 %v131
    %v392 = vunpack.c.l.b16 %v132
    %v393 = vunpack.c.l.b16 %v133
    %v394 = vunpack.c.l.b16 %v134
    %v395 = vunpack.c.l.b16 %v135
    %v396 = vunpack.c.l.b16 %v136
    %v397 = vunpack.c.l.b16 %v137
    %v398 = vunpack.c.l.b16 %v138
    %v399 = vunpack.c.l.b16 %v139
    %v400 = vunpack.c.l.b16 %v140
    %v401 = vunpack.c.l.b16 %v141
    %v402 = vunpack.c.l.b16 %v142
    %v403 = vunpack.c.l.b16 %v143
    %v404 = vunpack.c.l.b16 %v144
    %v405 = vunpack.c.l.b16 %v145
    %v406 = vunpack.c.l.b16 %v146
    %v407 = vunpack.c.l.b16 %v147
    %v408 = vunpack.c.l.b16 %v148
    %v409 = vunpack.c.l.b16 %v149
    %v410 = vunpack.c.l.b16 %v150
    %v411 = vunpack.c.l.b16 %v151
    %v412 = vunpack.c.l.b16 %v152
    %v413 = vunpack.c.l.b16 %v153
    %v414 = vunpack.c.l.b16 %v154
    %v415 = vunpack.c.l.b16 %v155
    %v416 = vunpack.c.l.b16 %v156
    %v417 = vunpack.c.l.b16 %v157
    %v418 = vunpack.c.l.b16 %v158
    %v419 = vunpack.c.l.b16 %v159
    %v420 = vunpack.c.l.b16 %v160
    %v421 = vunpack.c.l.b16 %v161
    %v422 = vunpack.c.l.b16 %v162
    %v423 = vunpack.c.l.b16 %v163
    %v424 = vunpack.c.l.b16 %v164
    %v425 = vunpack.c.l.b16 %v165
    %v426 = vpack.c.b16 %v299, %v298
    %v427 = vpack.c.b16 %v301, %v300
    %v428 = vpack.c.b16 %v303, %v302
    %v429 = vpack.c.b16 %v305, %v304
    %v430 = vpack.c.b16 %v307, %v306
    %v431 = vpack.c.b16 %v309, %v308
    %v432 = vpack.c.b16 %v311, %v310
    %v433 = vpack.c.b16 %v313, %v312
    %v434 = vpack.c.b16 %v315, %v314
    %v435 = vpack.c.b16 %v317, %v316
    %v436 = vpack.c.b16 %v319, %v318
    %v437 = vpack.c.b16 %v321, %v320
    %v438 = vpack.c.b16 %v323, %v322
    %v439 = vpack.c.b16 %v325, %v324
    %v440 = vpack.c.b16 %v327, %v326
    %v441 = vpack.c.b16 %v329, %v328
    %v442 = vpack.c.b16 %v331, %v330
    %v443 = vpack.c.b16 %v333, %v332
    %v444 = vpack.c.b16 %v335, %v334
    %v445 = vpack.c.b16 %v337, %v336
    %v446 = vpack.c.b16 %v339, %v338
    %v447 = vpack.c.b16 %v341, %v340
    %v448 = vpack.c.b16 %v343, %v342
    %v449 = vpack.c.b16 %v345, %v344
    %v450 = vpack.c.b16 %v347, %v346
    %v451 = vpack.c.b16 %v349, %v348
    %v452 = vpack.c.b16 %v351, %v350
    %v453 = vpack.c.b16 %v353, %v352
    %v454 = vpack.c.b16 %v355, %v354
    %v455 = vpack.c.b16 %v357, %v356
    %v456 = vpack.c.b16 %v359, %v358
    %v457 = vpack.c.b16 %v361, %v360
    %v458 = vpack.c.b16 %v363, %v362
    %v459 = vpack.c.b16 %v365, %v364
    %v460 = vpack.c.b16 %v367, %v366
    %v461 = vpack.c.b16 %v369, %v368
    %v462 = vpack.c.b16 %v371, %v370
    %v463 = vpack.c.b16 %v373, %v372
    %v464 = vpack.c.b16 %v375, %v374
    %v465 = vpack.c.b16 %v377, %v376
    %v466 = vpack.c.b16 %v379, %v378
    %v467 = vpack.c.b16 %v381, %v380
    %v468 = vpack.c.b16 %v383, %v382
    %v469 = vpack.c.b16 %v385, %v384
    %v470 = vpack.c.b16 %v387, %v386
    %v471 = vpack.c.b16 %v389, %v388
    %v472 = vpack.c.b16 %v391, %v390
    %v473 = vpack.c.b16 %v393, %v392
    %v474 = vpack.c.b16 %v395, %v394
    %v475 = vpack.c.b16 %v397, %v396
    %v476 = vpack.c.b16 %v399, %v398
    %v477 = vpack.c.b16 %v401, %v400
    %v478 = vpack.c.b16 %v403, %v402
    %v479 = vpack.c.b16 %v405, %v404
    %v480 = vpack.c.b16 %v407, %v406
    %v481 = vpack.c.b16 %v409, %v408
    %v482 = vpack.c.b16 %v411, %v410
    %v483 = vpack.c.b16 %v413, %v412
    %v484 = vpack.c.b16 %v415, %v414
    %v485 = vpack.c.b16 %v417, %v416
    %v486 = vpack.c.b16 %v419, %v418
    %v487 = vpack.c.b16 %v421, %v420
    %v488 = vpack.c.b16 %v423, %v422
    %v489 = vpack.c.b16 %v425, %v424
    %554 = vmatpush.bf16.msra.mxu0 %v433
    %555 = vmatpush.bf16.msra.mxu0 %v432
    %556 = vmatpush.bf16.msra.mxu0 %v431
    %557 = vmatpush.bf16.msra.mxu0 %v430
    %558 = vmatpush.bf16.msra.mxu0 %v429
    %559 = vmatpush.bf16.msra.mxu0 %v428
    %560 = vmatpush.bf16.msra.mxu0 %v427
    %561 = vmatpush.bf16.msra.mxu0 %v426
    %562 = vmatmul.bf16.gmra.mxu0 %v30
    %v563 = vpop.f32.mrf.mxu0
    %v564 = vadd.f32 %v168, %v563
    %v565 = vpop.f32.mrf.mxu0
    %566 = vdwg.mxu0
    %567 = vmatpush.bf16.msra.mxu0 %v441
    %568 = vmatpush.bf16.msra.mxu0 %v440
    %569 = vmatpush.bf16.msra.mxu0 %v439
    %570 = vmatpush.bf16.msra.mxu0 %v438
    %571 = vmatpush.bf16.msra.mxu0 %v437
    %572 = vmatpush.bf16.msra.mxu0 %v436
    %573 = vmatpush.bf16.msra.mxu0 %v435
    %574 = vmatpush.bf16.msra.mxu0 %v434
    %575 = vmatmul.bf16.gmra.mxu0 %v31
    %v576 = vpop.f32.mrf.mxu0
    %v577 = vadd.f32 %v564, %v576
    %v578 = vpop.f32.mrf.mxu0
    %579 = vdwg.mxu0
    %580 = vmatpush.bf16.msra.mxu0 %v449
    %581 = vmatpush.bf16.msra.mxu0 %v448
    %582 = vmatpush.bf16.msra.mxu0 %v447
    %583 = vmatpush.bf16.msra.mxu0 %v446
    %584 = vmatpush.bf16.msra.mxu0 %v445
    %585 = vmatpush.bf16.msra.mxu0 %v444
    %586 = vmatpush.bf16.msra.mxu0 %v443
    %587 = vmatpush.bf16.msra.mxu0 %v442
    %588 = vmatmul.bf16.gmra.mxu0 %v32
    %v589 = vpop.f32.mrf.mxu0
    %v590 = vadd.f32 %v577, %v589
    %v591 = vpop.f32.mrf.mxu0
    %592 = vdwg.mxu0
    %593 = vmatpush.bf16.msra.mxu0 %v457
    %594 = vmatpush.bf16.msra.mxu0 %v456
    %595 = vmatpush.bf16.msra.mxu0 %v455
    %596 = vmatpush.bf16.msra.mxu0 %v454
    %597 = vmatpush.bf16.msra.mxu0 %v453
    %598 = vmatpush.bf16.msra.mxu0 %v452
    %599 = vmatpush.bf16.msra.mxu0 %v451
    %600 = vmatpush.bf16.msra.mxu0 %v450
    %601 = vmatmul.bf16.gmra.mxu0 %v33
    %v602 = vpop.f32.mrf.mxu0
    %v603 = vadd.f32 %v590, %v602
    %v604 = vpop.f32.mrf.mxu0
    %605 = vdwg.mxu0
    %606 = vmatpush.bf16.msra.mxu0 %v465
    %607 = vmatpush.bf16.msra.mxu0 %v464
    %608 = vmatpush.bf16.msra.mxu0 %v463
    %609 = vmatpush.bf16.msra.mxu0 %v462
    %610 = vmatpush.bf16.msra.mxu0 %v461
    %611 = vmatpush.bf16.msra.mxu0 %v460
    %612 = vmatpush.bf16.msra.mxu0 %v459
    %613 = vmatpush.bf16.msra.mxu0 %v458
    %614 = vmatmul.bf16.gmra.mxu0 %v34
    %v615 = vpop.f32.mrf.mxu0
    %v616 = vadd.f32 %v603, %v615
    %v617 = vpop.f32.mrf.mxu0
    %618 = vdwg.mxu0
    %619 = vmatpush.bf16.msra.mxu0 %v473
    %620 = vmatpush.bf16.msra.mxu0 %v472
    %621 = vmatpush.bf16.msra.mxu0 %v471
    %622 = vmatpush.bf16.msra.mxu0 %v470
    %623 = vmatpush.bf16.msra.mxu0 %v469
    %624 = vmatpush.bf16.msra.mxu0 %v468
    %625 = vmatpush.bf16.msra.mxu0 %v467
    %626 = vmatpush.bf16.msra.mxu0 %v466
    %627 = vmatmul.bf16.gmra.mxu0 %v35
    %v628 = vpop.f32.mrf.mxu0
    %v629 = vadd.f32 %v616, %v628
    %v630 = vpop.f32.mrf.mxu0
    %631 = vdwg.mxu0
    %632 = vmatpush.bf16.msra.mxu0 %v481
    %633 = vmatpush.bf16.msra.mxu0 %v480
    %634 = vmatpush.bf16.msra.mxu0 %v479
    %635 = vmatpush.bf16.msra.mxu0 %v478
    %636 = vmatpush.bf16.msra.mxu0 %v477
    %637 = vmatpush.bf16.msra.mxu0 %v476
    %638 = vmatpush.bf16.msra.mxu0 %v475
    %639 = vmatpush.bf16.msra.mxu0 %v474
    %640 = vmatmul.bf16.gmra.mxu0 %v36
    %v641 = vpop.f32.mrf.mxu0
    %v642 = vadd.f32 %v629, %v641
    %v643 = vpop.f32.mrf.mxu0
    %644 = vdwg.mxu0
    %645 = vmatpush.bf16.msra.mxu0 %v489
    %646 = vmatpush.bf16.msra.mxu0 %v488
    %647 = vmatpush.bf16.msra.mxu0 %v487
    %648 = vmatpush.bf16.msra.mxu0 %v486
    %649 = vmatpush.bf16.msra.mxu0 %v485
    %650 = vmatpush.bf16.msra.mxu0 %v484
    %651 = vmatpush.bf16.msra.mxu0 %v483
    %652 = vmatpush.bf16.msra.mxu0 %v482
    %653 = vmatmul.bf16.gmra.mxu0 %v37
    %v654 = vpop.f32.mrf.mxu0
    %v655 = vadd.f32 %v642, %v654
    %v656 = vpop.f32.mrf.mxu0
    %657 = vdwg.mxu0
    %v658 = vmax.f32 %v655, 0.0
    %v659 = vpack.c.bf16 %v658, %v658
    %v660 = vld [vmem:[%s3] sm:$0xf]
    %v661 = vld [vmem:[%s3 + $0x4] sm:$0xf]
    %v662 = vld [vmem:[%s3 + $0x8] sm:$0xf]
    %v663 = vld [vmem:[%s3 + $0xc] sm:$0xf]
    %v664 = vld [vmem:[%s4] sm:$0x1]
    %v666 = vperm.slane %v664, 0
    %v672 = vunpack.c.l.b16 %v660
    %v673 = vunpack.c.l.b16 %v661
    %v674 = vunpack.c.l.b16 %v662
    %v675 = vunpack.c.l.b16 %v663
    %v676 = vpack.c.b16 %v673, %v672
    %v677 = vpack.c.b16 %v675, %v674
    %vm680 = vcmask 261120
    %v682 = vsel %vm680, %v659, 0
    %684 = vmatpush.bf16.msra.mxu0 0
    %685 = vmatpush.bf16.msra.mxu0 0
    %686 = vmatpush.bf16.msra.mxu0 0
    %687 = vmatpush.bf16.msra.mxu0 0
    %688 = vmatpush.bf16.msra.mxu0 0
    %689 = vmatpush.bf16.msra.mxu0 0
    %690 = vmatpush.bf16.msra.mxu0 %v677
    %691 = vmatpush.bf16.msra.mxu0 %v676
    %692 = vmatmul.bf16.gmra.mxu0 %v682
    %v693 = vpop.f32.mrf.mxu0
    %v694 = vadd.f32 %v666, %v693
    %v695 = vpop.f32.mrf.mxu0
    %696 = vdwg.mxu0
    %vm697 = vcmask 97280
    %698 = vst.msk [vmem:[#allocation2] sm:$0xff] %vm697, %v694
    // Predicated region
    $region22: #{tpu_custom_call.1} parent=1 // pred_check
      _
    $region23: #{tpu_custom_call.1} parent=1 // pred_check_branch
      %700 = sbr.rel (0) target = $region25
    $region24: #{tpu_custom_call.1} parent=1 // pred_region
      %702 = vsyncadd [#allocation3], 0
      %s704 = sshll.u32 [#allocation2], 4
      %s705 = int_to_ptr.vmem [resolvable:$true] %s704
      %s706 = sshll.u32 %s5, 4
      %s707 = int_to_ptr.hbm [resolvable:$true] %s706
      %709 = dma.vmem_to_hbm [thread:$0]  %s705, 128, %s707, [#allocation3]
    $region25: #{tpu_custom_call.1} parent=1 // pred_fallthru
      _
    // Predicated region
    $region26: #{tpu_custom_call.1} parent=1 // pred_check
      _
    $region27: #{tpu_custom_call.1} parent=1 // pred_check_branch
      %711 = sbr.rel (0) target = $region29
    $region28: #{tpu_custom_call.1} parent=1 // pred_region
      %713 = dma.done [#allocation3], 128
    $region29: #{tpu_custom_call.1} parent=1 // pred_fallthru
      _
    %714 = vsyncpa [#allocation3], 1

</llo_original>
